<compile_context>
chip_gen: v6e
topology: v6e:2x2x1
jax: 0.10.0
libtpu: 0.0.40
codegen_flags: <defaults>
</compile_context>

<pallas_src>
import math

import jax
import jax.numpy as jnp
import numpy as np
from jax.experimental import pallas as pl
from jax.experimental.pallas import tpu as pltpu


_GATES = {"f": ("z", "f"), "fo": ("z", "f", "o"), "ifo": ("z", "f", "o", "i")}


def _sigmoid(x):
    # sigmoid via tanh: one EUP op instead of exp + reciprocal.
    return 0.5 * (jnp.tanh(0.5 * x) + 1.0)


def _choose_hidden_tile(H):
    """Hidden tile: multiple of 128, prefer >=2 tiles (v7x has 2 TCs), else full H."""
    if H % 128 != 0:
        return H          # perf cliff (masked partial stores), but correct
    for th in (512, 256, 128):
        if H % th == 0 and H // th >= 2:
            return th
    for th in (512, 256, 128):
        if H % th == 0:
            return th
    return H


def _vmem_capacity_bytes():
    try:
        info = pltpu.get_tpu_info()
        cap = getattr(info, "vmem_capacity_bytes", None)
        if cap:
            return int(cap)
    except Exception:
        pass
    return 64 * 1024 * 1024   # conservative default (v7x per-core VMEM)


def _vmem_est_bytes(TC, B, KC, TH, G, n_gate_sc, n_out):
    """Rough per-grid-step VMEM estimate (double-buffered I/O + scratch + temps)."""
    rows = TC * B
    xc = 2 * rows * KC * 2               # bf16 input block, double buffered
    w = 2 * KC * G * TH * 2              # bf16 fused weights, double buffered
    bias = 2 * G * TH * 4
    outs = 2 * n_out * rows * TH * 4     # f32 outputs, double buffered
    scr = n_gate_sc * rows * TH * 4 + B * TH * 4
    tmp = 2 * rows * G * TH * 4          # matmul result + activation temporaries
    return xc + w + bias + outs + scr + tmp


def _choose_time_chunk(T, B, KC, TH, G, n_gate_sc, n_out, budget_bytes):
    """Largest time chunk (TC*B a multiple of 16 for bf16 sublane tiling) under budget."""
    q = 16 // math.gcd(B, 16)
    t_full = ((T + q - 1) // q) * q
    cands = sorted({min(t_full, m * q) for m in (256, 128, 64, 32, 16, 8, 4, 2, 1)},
                   reverse=True)
    tc = cands[-1]
    for c in cands:
        if _vmem_est_bytes(c, B, KC, TH, G, n_gate_sc, n_out) <= budget_bytes:
            tc = c
            break
    t_pad = ((T + tc - 1) // tc) * tc
    return tc, t_pad


def _make_qrnn_kernel(pooling, TC):
    has_c = pooling != "f"
    has_o = pooling in ("fo", "ifo")

    def kernel(xc_ref, w_ref, b_ref, *rest):
        if has_c:
            h_ref, c_ref = rest[0], rest[1]
            scratch = rest[2:]
        else:
            h_ref = rest[0]
            c_ref = h_ref            # for 'f' the state buffer IS the h output
            scratch = rest[1:]
        carry_ref = scratch[0]       # persistent (B, TH) state across T-chunks
        f_sc, g_sc = scratch[1], scratch[2]
        o_sc = scratch[3] if has_o else None

        Bq, TH = carry_ref.shape

        @pl.when(pl.program_id(1) == 0)
        def _init():
            carry_ref[...] = jnp.zeros_like(carry_ref)

        # One fused bf16 MXU matmul for all live gates of this (H-tile, T-chunk);
        # accumulate in f32, bias add and activations in f32.
        gates = jnp.dot(xc_ref[...], w_ref[0],
                        preferred_element_type=jnp.float32) + b_ref[0]

        z = jnp.tanh(gates[:, 0:TH])
        f = _sigmoid(gates[:, TH:2 * TH])
        f_sc[...] = f
        if pooling == "ifo":
            i_g = _sigmoid(gates[:, 3 * TH:4 * TH])
            g_sc[...] = i_g * z                      # i*tanh(z), outside the chain
        else:
            g_sc[...] = (1.0 - f) * z                # (1-f)*tanh(z), outside the chain
        if has_o:
            o_sc[...] = _sigmoid(gates[:, 2 * TH:3 * TH])

        aligned = (Bq % 8 == 0)

        # Serial recurrence: one FMA + one store per timestep, state in vregs.
        def body(t, c_prev):
            row = t * Bq
            if aligned:
                row = pl.multiple_of(row, 8)
            f_t = f_sc[pl.ds(row, Bq), :]
            g_t = g_sc[pl.ds(row, Bq), :]
            c_t = f_t * c_prev + g_t
            c_ref[pl.ds(row, Bq), :] = c_t
            return c_t

        # Unroll bounded by vreg pressure: ~2 live gate loads per step.
        unroll = max(1, min(8, TC, (128 * 1024) // max(1, 8 * Bq * TH)))
        c_last = jax.lax.fori_loop(0, TC, body, carry_ref[...], unroll=unroll)
        carry_ref[...] = c_last

        if has_o:
            # Dense lane-wide pass over the whole chunk, kept off the serial chain.
            h_ref[...] = o_sc[...] * c_ref[...]

    return kernel


def qrnn_layer_forward(x, params, *, kernel_size=2, pooling="fo"):
    """x: (B, C, T) float32 (PyTorch Conv1d NCW). Returns (h, c) each (B, H, T)."""
    B, C, T = x.shape
    K = kernel_size
    H = params["w_z"].shape[0]
    KC = K * C
    gate_names = _GATES[pooling]
    G = len(gate_names)
    has_c = pooling != "f"
    n_out = 2 if has_c else 1
    n_gate_sc = 3 if has_c else 2      # f, g (and o)

    TH = _choose_hidden_tile(H)
    nH = H // TH

    vmem_cap = _vmem_capacity_bytes()
    budget = int(0.40 * vmem_cap)
    TC, T_pad = _choose_time_chunk(T, B, KC, TH, G, n_gate_sc, n_out, budget)
    nT = T_pad // TC

    # im2col glue (plain JAX): left zero-pad time; features are k-major/c-minor,
    # flattened into a 2-D (T*B, K*C) slab, padded along T to a multiple of TC,
    # and cast to bf16 for the MXU.
    x_pad = jnp.pad(x.astype(jnp.float32), ((0, 0), (0, 0), (K - 1, 0)))
    cols = jnp.concatenate([x_pad[:, :, k:k + T] for k in range(K)], axis=1)   # (B, K*C, T)
    xc = jnp.transpose(cols, (2, 0, 1)).reshape(T * B, KC)
    if T_pad > T:
        xc = jnp.pad(xc, ((0, (T_pad - T) * B), (0, 0)))
    xc = xc.astype(jnp.bfloat16)

    def flat_w(w):  # torch Conv1d weight (H, C, K) -> (K*C, H), k-major/c-minor rows
        return jnp.transpose(w, (2, 1, 0)).reshape(KC, H).astype(jnp.float32)

    # Fused per-hidden-tile weights/bias: (nH, K*C, G*TH) bf16 / (nH, 1, G*TH) f32;
    # gates are concatenated along the lane axis for one lane-dense matmul.
    w_stack = jnp.stack(
        [flat_w(params["w_" + g]).reshape(KC, nH, TH) for g in gate_names], axis=2)
    w_all = jnp.transpose(w_stack, (1, 0, 2, 3)).reshape(nH, KC, G * TH).astype(jnp.bfloat16)
    b_stack = jnp.stack(
        [params["b_" + g].astype(jnp.float32).reshape(nH, TH) for g in gate_names], axis=1)
    b_all = b_stack.reshape(nH, 1, G * TH)

    out_shape = [jax.ShapeDtypeStruct((T_pad * B, H), jnp.float32)] * n_out

    scratch_shapes = [pltpu.VMEM((B, TH), jnp.float32)]                 # carry state
    scratch_shapes += [pltpu.VMEM((TC * B, TH), jnp.float32)] * n_gate_sc

    vmem_limit = int(min(int(0.875 * vmem_cap),
                         max(2 * _vmem_est_bytes(TC, B, KC, TH, G, n_gate_sc, n_out),
                             16 * 1024 * 1024)))

    out = pl.pallas_call(
        _make_qrnn_kernel(pooling, TC),
        grid=(nH, nT),
        out_shape=out_shape,
        in_specs=[
            pl.BlockSpec((TC * B, KC), lambda j, t: (t, 0)),          # xc per T-chunk
            pl.BlockSpec((1, KC, G * TH), lambda j, t: (j, 0, 0)),    # fused weights per H-tile
            pl.BlockSpec((1, 1, G * TH), lambda j, t: (j, 0, 0)),     # fused bias per H-tile
        ],
        out_specs=[pl.BlockSpec((TC * B, TH), lambda j, t: (t, j))] * n_out,
        scratch_shapes=scratch_shapes,
        compiler_params=pltpu.CompilerParams(
            dimension_semantics=("parallel", "arbitrary"),   # H tiles parallel, T sequential
            vmem_limit_bytes=vmem_limit,                     # derived from tiles / device VMEM
        ),
    )(xc, w_all, b_all)

    def to_nct(y):   # (T_pad*B, H) -> (B, H, T) to match the torch output layout
        y = y.reshape(T_pad, B, H)[:T]
        return jnp.transpose(y, (1, 2, 0))

    h = to_nct(out[0])
    if not has_c:
        return h, None
    return h, to_nct(out[1])


def qrnn_ref(x, params, *, kernel_size=2, pooling="fo", mxu_dtype=jnp.float32):
    """Pure-JAX reference (eval-mode zoneout). mxu_dtype controls conv input precision."""
    B, C, T = x.shape
    K = kernel_size
    H = params["w_z"].shape[0]
    x_pad = jnp.pad(x.astype(jnp.float32), ((0, 0), (0, 0), (K - 1, 0)))

    def conv(w, b):
        out = jax.lax.conv_general_dilated(
            x_pad.astype(mxu_dtype), w.astype(mxu_dtype),
            window_strides=(1,), padding="VALID",
            dimension_numbers=("NCH", "OIH", "NCH"),
            preferred_element_type=jnp.float32)
        return out + b.astype(jnp.float32)[None, :, None]

    z = jnp.tanh(conv(params["w_z"], params["b_z"]))
    f = jax.nn.sigmoid(conv(params["w_f"], params["b_f"]))
    o = jax.nn.sigmoid(conv(params["w_o"], params["b_o"]))
    i = jax.nn.sigmoid(conv(params["w_i"], params["b_i"]))

    h_prev = jnp.zeros((B, H), jnp.float32)
    c_prev = jnp.zeros((B, H), jnp.float32)
    h_list, c_list = [], []
    for t in range(T):
        z_t, f_t, o_t, i_t = z[:, :, t], f[:, :, t], o[:, :, t], i[:, :, t]
        if pooling == "f":
            h_prev = f_t * h_prev + (1 - f_t) * z_t
            c_prev = None
        elif pooling == "fo":
            c_prev = f_t * c_prev + (1 - f_t) * z_t
            h_prev = o_t * c_prev
        else:
            c_prev = f_t * c_prev + i_t * z_t
            h_prev = o_t * c_prev
        h_list.append(h_prev)
        if c_prev is not None:
            c_list.append(c_prev)
    h = jnp.stack(h_list, axis=2)
    c = jnp.stack(c_list, axis=2) if c_list else None
    return h, c


if __name__ == "__main__":
    B, C, T, H, K = 2, 4, 8, 32, 2  # batch, input_size, seq_len, hidden_size, kernel_size

    key = jax.random.PRNGKey(0)
    keys = jax.random.split(key, 9)
    bound = 1.0 / np.sqrt(C * K)  # PyTorch Conv1d default init bound
    params = {}
    for idx, g in enumerate("zfoi"):
        params["w_" + g] = jax.random.uniform(keys[idx], (H, C, K), jnp.float32, -bound, bound)
        params["b_" + g] = jax.random.uniform(keys[idx + 4], (H,), jnp.float32, -bound, bound)
    x = jax.random.normal(keys[8], (B, C, T), jnp.float32)

    h, c = qrnn_layer_forward(x, params, kernel_size=K, pooling="fo")
    jax.block_until_ready((h, c))

    # Structural check vs a reference using the same bf16 MXU inputs (tight tol).
    h_q, c_q = qrnn_ref(x, params, kernel_size=K, pooling="fo", mxu_dtype=jnp.bfloat16)
    np.testing.assert_allclose(np.asarray(h), np.asarray(h_q), atol=2e-3, rtol=2e-3)
    np.testing.assert_allclose(np.asarray(c), np.asarray(c_q), atol=2e-3, rtol=2e-3)

    # End-to-end fidelity vs the pure-f32 spec; looser tolerance because the bf16
    # MXU cast is an intentional perf trade (review item).
    h_f, c_f = qrnn_ref(x, params, kernel_size=K, pooling="fo", mxu_dtype=jnp.float32)
    np.testing.assert_allclose(np.asarray(h), np.asarray(h_f), atol=5e-2, rtol=5e-2)
    np.testing.assert_allclose(np.asarray(c), np.asarray(c_f), atol=5e-2, rtol=5e-2)

    print("KERNEL_OK")
</pallas_src>

<mosaic_0001>
module attributes {stable_mosaic.version = 11 : i64} {
  func.func @kernel(%arg0: i32, %arg1: i32, %arg2: memref<16x8xbf16, #tpu.memory_space<vmem>>, %arg3: memref<1x8x96xbf16, #tpu.memory_space<vmem>>, %arg4: memref<1x1x96xf32, #tpu.memory_space<vmem>>, %arg5: memref<16x32xf32, #tpu.memory_space<vmem>>, %arg6: memref<16x32xf32, #tpu.memory_space<vmem>>, %arg7: memref<2x32xf32, #tpu.memory_space<vmem>>, %arg8: memref<16x32xf32, #tpu.memory_space<vmem>>, %arg9: memref<16x32xf32, #tpu.memory_space<vmem>>, %arg10: memref<16x32xf32, #tpu.memory_space<vmem>>) attributes {dimension_semantics = [#tpu.dimension_semantics<parallel>, #tpu.dimension_semantics<arbitrary>], iteration_bounds = array<i64: 1, 1>, scalar_prefetch = 0 : i64, scratch_operands = 4 : i64, tpu.core_type = #tpu.core_type<tc>, window_params = [{transform_indices = @transform_0, window_bounds = array<i64: 16, 8>}, {transform_indices = @transform_1, window_bounds = array<i64: 1, 8, 96>}, {transform_indices = @transform_2, window_bounds = array<i64: 1, 1, 96>}, {transform_indices = @transform_3, window_bounds = array<i64: 16, 32>}, {transform_indices = @transform_4, window_bounds = array<i64: 16, 32>}]} {
    %c0_i32 = arith.constant 0 : i32
    %0 = arith.cmpi eq, %arg1, %c0_i32 : i32
    %1 = arith.extui %0 : i1 to i32
    %c0_i32_0 = arith.constant 0 : i32
    %2 = arith.cmpi ne, %1, %c0_i32_0 : i32
    scf.if %2 {
      %cst_64 = arith.constant 0.000000e+00 : f32
      %113 = vector.broadcast %cst_64 : f32 to vector<2x32xf32>
      %c0_65 = arith.constant 0 : index
      %c0_66 = arith.constant 0 : index
      %114 = vector.load %arg7[%c0_65, %c0_66] : memref<2x32xf32, #tpu.memory_space<vmem>>, vector<2x32xf32>
      tpu.vector_store %arg7[%c0_65, %c0_66], %113 {strides = array<i32>} : memref<2x32xf32, #tpu.memory_space<vmem>>, vector<2x32xf32>,
    } else {
    }
    %c0 = arith.constant 0 : index
    %c0_1 = arith.constant 0 : index
    %3 = vector.load %arg2[%c0, %c0_1] : memref<16x8xbf16, #tpu.memory_space<vmem>>, vector<16x8xbf16>
    %c0_2 = arith.constant 0 : index
    %c0_3 = arith.constant 0 : index
    %c0_4 = arith.constant 0 : index
    %4 = vector.load %arg3[%c0_2, %c0_3, %c0_4] : memref<1x8x96xbf16, #tpu.memory_space<vmem>>, vector<1x8x96xbf16>
    %5 = vector.shape_cast %4 : vector<1x8x96xbf16> to vector<8x96xbf16>
    %cst = arith.constant dense<0.000000e+00> : vector<16x96xf32>
    %6 = tpu.matmul %3, %5, %cst {dimension_numbers = #tpu.dot_dimension_numbers<[1], [0], [0], [1], [0, 0, 1, 1], [], []>} : vector<16x8xbf16>, vector<8x96xbf16>, vector<16x96xf32> -> vector<16x96xf32>
    %c0_5 = arith.constant 0 : index
    %c0_6 = arith.constant 0 : index
    %c0_7 = arith.constant 0 : index
    %7 = vector.load %arg4[%c0_5, %c0_6, %c0_7] : memref<1x1x96xf32, #tpu.memory_space<vmem>>, vector<1x1x96xf32>
    %8 = vector.shape_cast %7 : vector<1x1x96xf32> to vector<1x96xf32>
    %9 = vector.broadcast %8 : vector<1x96xf32> to vector<16x96xf32>
    %10 = arith.addf %6, %9 : vector<16x96xf32>
    %11 = vector.extract_strided_slice %10 {offsets = [0, 0], sizes = [16, 32], strides = [1, 1]} : vector<16x96xf32> to vector<16x32xf32>
    %12 = math.tanh %11 : vector<16x32xf32>
    %13 = vector.extract_strided_slice %10 {offsets = [0, 32], sizes = [16, 32], strides = [1, 1]} : vector<16x96xf32> to vector<16x32xf32>
    %cst_8 = arith.constant 5.000000e-01 : f32
    %14 = vector.broadcast %cst_8 : f32 to vector<16x32xf32>
    %15 = arith.mulf %14, %13 : vector<16x32xf32>
    %16 = math.tanh %15 : vector<16x32xf32>
    %cst_9 = arith.constant 1.000000e+00 : f32
    %17 = vector.broadcast %cst_9 : f32 to vector<16x32xf32>
    %18 = arith.addf %16, %17 : vector<16x32xf32>
    %cst_10 = arith.constant 5.000000e-01 : f32
    %19 = vector.broadcast %cst_10 : f32 to vector<16x32xf32>
    %20 = arith.mulf %19, %18 : vector<16x32xf32>
    %c0_11 = arith.constant 0 : index
    %c0_12 = arith.constant 0 : index
    %21 = vector.load %arg8[%c0_11, %c0_12] : memref<16x32xf32, #tpu.memory_space<vmem>>, vector<16x32xf32>
    tpu.vector_store %arg8[%c0_11, %c0_12], %20 {strides = array<i32>} : memref<16x32xf32, #tpu.memory_space<vmem>>, vector<16x32xf32>,
    %cst_13 = arith.constant 1.000000e+00 : f32
    %22 = vector.broadcast %cst_13 : f32 to vector<16x32xf32>
    %23 = arith.subf %22, %20 : vector<16x32xf32>
    %24 = arith.mulf %23, %12 : vector<16x32xf32>
    %c0_14 = arith.constant 0 : index
    %c0_15 = arith.constant 0 : index
    %25 = vector.load %arg9[%c0_14, %c0_15] : memref<16x32xf32, #tpu.memory_space<vmem>>, vector<16x32xf32>
    tpu.vector_store %arg9[%c0_14, %c0_15], %24 {strides = array<i32>} : memref<16x32xf32, #tpu.memory_space<vmem>>, vector<16x32xf32>,
    %26 = vector.extract_strided_slice %10 {offsets = [0, 64], sizes = [16, 32], strides = [1, 1]} : vector<16x96xf32> to vector<16x32xf32>
    %cst_16 = arith.constant 5.000000e-01 : f32
    %27 = vector.broadcast %cst_16 : f32 to vector<16x32xf32>
    %28 = arith.mulf %27, %26 : vector<16x32xf32>
    %29 = math.tanh %28 : vector<16x32xf32>
    %cst_17 = arith.constant 1.000000e+00 : f32
    %30 = vector.broadcast %cst_17 : f32 to vector<16x32xf32>
    %31 = arith.addf %29, %30 : vector<16x32xf32>
    %cst_18 = arith.constant 5.000000e-01 : f32
    %32 = vector.broadcast %cst_18 : f32 to vector<16x32xf32>
    %33 = arith.mulf %32, %31 : vector<16x32xf32>
    %c0_19 = arith.constant 0 : index
    %c0_20 = arith.constant 0 : index
    %34 = vector.load %arg10[%c0_19, %c0_20] : memref<16x32xf32, #tpu.memory_space<vmem>>, vector<16x32xf32>
    tpu.vector_store %arg10[%c0_19, %c0_20], %33 {strides = array<i32>} : memref<16x32xf32, #tpu.memory_space<vmem>>, vector<16x32xf32>,
    %c0_21 = arith.constant 0 : index
    %c0_22 = arith.constant 0 : index
    %35 = vector.load %arg7[%c0_21, %c0_22] : memref<2x32xf32, #tpu.memory_space<vmem>>, vector<2x32xf32>
    %c0_i32_23 = arith.constant 0 : i32
    %c2_i32 = arith.constant 2 : i32
    %36 = arith.muli %c0_i32_23, %c2_i32 : i32
    %37 = arith.index_cast %36 : i32 to index
    %c0_24 = arith.constant 0 : index
    %38 = vector.load %arg8[%37, %c0_24] : memref<16x32xf32, #tpu.memory_space<vmem>>, vector<2x32xf32>
    %39 = arith.index_cast %36 : i32 to index
    %c0_25 = arith.constant 0 : index
    %40 = vector.load %arg9[%39, %c0_25] : memref<16x32xf32, #tpu.memory_space<vmem>>, vector<2x32xf32>
    %41 = arith.mulf %38, %35 : vector<2x32xf32>
    %42 = arith.addf %41, %40 : vector<2x32xf32>
    %43 = arith.index_cast %36 : i32 to index
    %c0_26 = arith.constant 0 : index
    %44 = vector.load %arg6[%43, %c0_26] : memref<16x32xf32, #tpu.memory_space<vmem>>, vector<2x32xf32>
    tpu.vector_store %arg6[%43, %c0_26], %42 {strides = array<i32>} : memref<16x32xf32, #tpu.memory_space<vmem>>, vector<2x32xf32>,
    %c1_i32 = arith.constant 1 : i32
    %c2_i32_27 = arith.constant 2 : i32
    %45 = arith.muli %c1_i32, %c2_i32_27 : i32
    %46 = arith.index_cast %45 : i32 to index
    %c0_28 = arith.constant 0 : index
    %47 = vector.load %arg8[%46, %c0_28] : memref<16x32xf32, #tpu.memory_space<vmem>>, vector<2x32xf32>
    %48 = arith.index_cast %45 : i32 to index
    %c0_29 = arith.constant 0 : index
    %49 = vector.load %arg9[%48, %c0_29] : memref<16x32xf32, #tpu.memory_space<vmem>>, vector<2x32xf32>
    %50 = arith.mulf %47, %42 : vector<2x32xf32>
    %51 = arith.addf %50, %49 : vector<2x32xf32>
    %52 = arith.index_cast %45 : i32 to index
    %c0_30 = arith.constant 0 : index
    %53 = vector.load %arg6[%52, %c0_30] : memref<16x32xf32, #tpu.memory_space<vmem>>, vector<2x32xf32>
    tpu.vector_store %arg6[%52, %c0_30], %51 {strides = array<i32>} : memref<16x32xf32, #tpu.memory_space<vmem>>, vector<2x32xf32>,
    %c2_i32_31 = arith.constant 2 : i32
    %c2_i32_32 = arith.constant 2 : i32
    %54 = arith.muli %c2_i32_31, %c2_i32_32 : i32
    %55 = arith.index_cast %54 : i32 to index
    %c0_33 = arith.constant 0 : index
    %56 = vector.load %arg8[%55, %c0_33] : memref<16x32xf32, #tpu.memory_space<vmem>>, vector<2x32xf32>
    %57 = arith.index_cast %54 : i32 to index
    %c0_34 = arith.constant 0 : index
    %58 = vector.load %arg9[%57, %c0_34] : memref<16x32xf32, #tpu.memory_space<vmem>>, vector<2x32xf32>
    %59 = arith.mulf %56, %51 : vector<2x32xf32>
    %60 = arith.addf %59, %58 : vector<2x32xf32>
    %61 = arith.index_cast %54 : i32 to index
    %c0_35 = arith.constant 0 : index
    %62 = vector.load %arg6[%61, %c0_35] : memref<16x32xf32, #tpu.memory_space<vmem>>, vector<2x32xf32>
    tpu.vector_store %arg6[%61, %c0_35], %60 {strides = array<i32>} : memref<16x32xf32, #tpu.memory_space<vmem>>, vector<2x32xf32>,
    %c3_i32 = arith.constant 3 : i32
    %c2_i32_36 = arith.constant 2 : i32
    %63 = arith.muli %c3_i32, %c2_i32_36 : i32
    %64 = arith.index_cast %63 : i32 to index
    %c0_37 = arith.constant 0 : index
    %65 = vector.load %arg8[%64, %c0_37] : memref<16x32xf32, #tpu.memory_space<vmem>>, vector<2x32xf32>
    %66 = arith.index_cast %63 : i32 to index
    %c0_38 = arith.constant 0 : index
    %67 = vector.load %arg9[%66, %c0_38] : memref<16x32xf32, #tpu.memory_space<vmem>>, vector<2x32xf32>
    %68 = arith.mulf %65, %60 : vector<2x32xf32>
    %69 = arith.addf %68, %67 : vector<2x32xf32>
    %70 = arith.index_cast %63 : i32 to index
    %c0_39 = arith.constant 0 : index
    %71 = vector.load %arg6[%70, %c0_39] : memref<16x32xf32, #tpu.memory_space<vmem>>, vector<2x32xf32>
    tpu.vector_store %arg6[%70, %c0_39], %69 {strides = array<i32>} : memref<16x32xf32, #tpu.memory_space<vmem>>, vector<2x32xf32>,
    %c4_i32 = arith.constant 4 : i32
    %c2_i32_40 = arith.constant 2 : i32
    %72 = arith.muli %c4_i32, %c2_i32_40 : i32
    %73 = arith.index_cast %72 : i32 to index
    %c0_41 = arith.constant 0 : index
    %74 = vector.load %arg8[%73, %c0_41] : memref<16x32xf32, #tpu.memory_space<vmem>>, vector<2x32xf32>
    %75 = arith.index_cast %72 : i32 to index
    %c0_42 = arith.constant 0 : index
    %76 = vector.load %arg9[%75, %c0_42] : memref<16x32xf32, #tpu.memory_space<vmem>>, vector<2x32xf32>
    %77 = arith.mulf %74, %69 : vector<2x32xf32>
    %78 = arith.addf %77, %76 : vector<2x32xf32>
    %79 = arith.index_cast %72 : i32 to index
    %c0_43 = arith.constant 0 : index
    %80 = vector.load %arg6[%79, %c0_43] : memref<16x32xf32, #tpu.memory_space<vmem>>, vector<2x32xf32>
    tpu.vector_store %arg6[%79, %c0_43], %78 {strides = array<i32>} : memref<16x32xf32, #tpu.memory_space<vmem>>, vector<2x32xf32>,
    %c5_i32 = arith.constant 5 : i32
    %c2_i32_44 = arith.constant 2 : i32
    %81 = arith.muli %c5_i32, %c2_i32_44 : i32
    %82 = arith.index_cast %81 : i32 to index
    %c0_45 = arith.constant 0 : index
    %83 = vector.load %arg8[%82, %c0_45] : memref<16x32xf32, #tpu.memory_space<vmem>>, vector<2x32xf32>
    %84 = arith.index_cast %81 : i32 to index
    %c0_46 = arith.constant 0 : index
    %85 = vector.load %arg9[%84, %c0_46] : memref<16x32xf32, #tpu.memory_space<vmem>>, vector<2x32xf32>
    %86 = arith.mulf %83, %78 : vector<2x32xf32>
    %87 = arith.addf %86, %85 : vector<2x32xf32>
    %88 = arith.index_cast %81 : i32 to index
    %c0_47 = arith.constant 0 : index
    %89 = vector.load %arg6[%88, %c0_47] : memref<16x32xf32, #tpu.memory_space<vmem>>, vector<2x32xf32>
    tpu.vector_store %arg6[%88, %c0_47], %87 {strides = array<i32>} : memref<16x32xf32, #tpu.memory_space<vmem>>, vector<2x32xf32>,
    %c6_i32 = arith.constant 6 : i32
    %c2_i32_48 = arith.constant 2 : i32
    %90 = arith.muli %c6_i32, %c2_i32_48 : i32
    %91 = arith.index_cast %90 : i32 to index
    %c0_49 = arith.constant 0 : index
    %92 = vector.load %arg8[%91, %c0_49] : memref<16x32xf32, #tpu.memory_space<vmem>>, vector<2x32xf32>
    %93 = arith.index_cast %90 : i32 to index
    %c0_50 = arith.constant 0 : index
    %94 = vector.load %arg9[%93, %c0_50] : memref<16x32xf32, #tpu.memory_space<vmem>>, vector<2x32xf32>
    %95 = arith.mulf %92, %87 : vector<2x32xf32>
    %96 = arith.addf %95, %94 : vector<2x32xf32>
    %97 = arith.index_cast %90 : i32 to index
    %c0_51 = arith.constant 0 : index
    %98 = vector.load %arg6[%97, %c0_51] : memref<16x32xf32, #tpu.memory_space<vmem>>, vector<2x32xf32>
    tpu.vector_store %arg6[%97, %c0_51], %96 {strides = array<i32>} : memref<16x32xf32, #tpu.memory_space<vmem>>, vector<2x32xf32>,
    %c7_i32 = arith.constant 7 : i32
    %c2_i32_52 = arith.constant 2 : i32
    %99 = arith.muli %c7_i32, %c2_i32_52 : i32
    %100 = arith.index_cast %99 : i32 to index
    %c0_53 = arith.constant 0 : index
    %101 = vector.load %arg8[%100, %c0_53] : memref<16x32xf32, #tpu.memory_space<vmem>>, vector<2x32xf32>
    %102 = arith.index_cast %99 : i32 to index
    %c0_54 = arith.constant 0 : index
    %103 = vector.load %arg9[%102, %c0_54] : memref<16x32xf32, #tpu.memory_space<vmem>>, vector<2x32xf32>
    %104 = arith.mulf %101, %96 : vector<2x32xf32>
    %105 = arith.addf %104, %103 : vector<2x32xf32>
    %106 = arith.index_cast %99 : i32 to index
    %c0_55 = arith.constant 0 : index
    %107 = vector.load %arg6[%106, %c0_55] : memref<16x32xf32, #tpu.memory_space<vmem>>, vector<2x32xf32>
    tpu.vector_store %arg6[%106, %c0_55], %105 {strides = array<i32>} : memref<16x32xf32, #tpu.memory_space<vmem>>, vector<2x32xf32>,
    %c8_i32 = arith.constant 8 : i32
    %c0_56 = arith.constant 0 : index
    %c0_57 = arith.constant 0 : index
    %108 = vector.load %arg7[%c0_56, %c0_57] : memref<2x32xf32, #tpu.memory_space<vmem>>, vector<2x32xf32>
    tpu.vector_store %arg7[%c0_56, %c0_57], %105 {strides = array<i32>} : memref<2x32xf32, #tpu.memory_space<vmem>>, vector<2x32xf32>,
    %c0_58 = arith.constant 0 : index
    %c0_59 = arith.constant 0 : index
    %109 = vector.load %arg10[%c0_58, %c0_59] : memref<16x32xf32, #tpu.memory_space<vmem>>, vector<16x32xf32>
    %c0_60 = arith.constant 0 : index
    %c0_61 = arith.constant 0 : index
    %110 = vector.load %arg6[%c0_60, %c0_61] : memref<16x32xf32, #tpu.memory_space<vmem>>, vector<16x32xf32>
    %111 = arith.mulf %109, %110 : vector<16x32xf32>
    %c0_62 = arith.constant 0 : index
    %c0_63 = arith.constant 0 : index
    %112 = vector.load %arg5[%c0_62, %c0_63] : memref<16x32xf32, #tpu.memory_space<vmem>>, vector<16x32xf32>
    tpu.vector_store %arg5[%c0_62, %c0_63], %111 {strides = array<i32>} : memref<16x32xf32, #tpu.memory_space<vmem>>, vector<16x32xf32>,
    return
  }
  func.func @transform_0(%arg0: i32, %arg1: i32) -> (i32, i32) {
    %c0_i32 = arith.constant 0 : i32
    %c0_i32_0 = arith.constant 0 : i32
    return %arg1, %c0_i32 : i32, i32
  }
  func.func @transform_1(%arg0: i32, %arg1: i32) -> (i32, i32, i32) {
    %c0_i32 = arith.constant 0 : i32
    %c0_i32_0 = arith.constant 0 : i32
    %c0_i32_1 = arith.constant 0 : i32
    return %arg0, %c0_i32, %c0_i32_0 : i32, i32, i32
  }
  func.func @transform_2(%arg0: i32, %arg1: i32) -> (i32, i32, i32) {
    %c0_i32 = arith.constant 0 : i32
    %c0_i32_0 = arith.constant 0 : i32
    %c0_i32_1 = arith.constant 0 : i32
    return %arg0, %c0_i32, %c0_i32_0 : i32, i32, i32
  }
  func.func @transform_3(%arg0: i32, %arg1: i32) -> (i32, i32) {
    %c0_i32 = arith.constant 0 : i32
    return %arg1, %arg0 : i32, i32
  }
  func.func @transform_4(%arg0: i32, %arg1: i32) -> (i32, i32) {
    %c0_i32 = arith.constant 0 : i32
    return %arg1, %arg0 : i32, i32
  }
}

</mosaic_0001>

<llo_original>
// kernel: tpu_custom_call.1
$region0: #{tpu_custom_call.1}
  #allocation0 [shape = 'u32[]', space=smem, size = 0x4, offset = 0x4, fixed_abs, tag = 'smem constant byte address 0x4 - core index']
  #allocation1 [shape = 'u32[144,128]{1,0:T(1,128)}', space=vmem, size = 0x12000, scoped, tag = 'internal scratch']
  #allocation2 [shape = 'f32[2,32]{1,0:T(2,128)}', space=vmem, size = 0x400, scoped, tag = 'scratch operand']
  #allocation3 [shape = 'f32[16,32]{1,0:T(8,128)}', space=vmem, size = 0x2000, scoped, tag = 'scratch operand']
  #allocation4 [shape = 'f32[16,32]{1,0:T(8,128)}', space=vmem, size = 0x2000, scoped, tag = 'scratch operand']
  #allocation5 [shape = 'f32[16,32]{1,0:T(8,128)}', space=vmem, size = 0x2000, scoped, tag = 'scratch operand']
  %s0 = inlined_call_operand.vmem [shape: bf16[16,8], index: 0, kind: input, shape index: {}]
  %s1 = inlined_call_operand.vmem [shape: bf16[1,8,96], index: 1, kind: input, shape index: {}]
  %s2 = inlined_call_operand.vmem [shape: f32[1,1,96], index: 2, kind: input, shape index: {}]
  %s3 = inlined_call_operand.hbm [shape: f32[16,32], index: 3, kind: output, shape index: {0}]
  %s4 = inlined_call_operand.hbm [shape: f32[16,32], index: 4, kind: output, shape index: {1}]
  %5 = xla_tuple %s3, %s4
  %s6 = sld [smem:[#allocation0]]
  $region34: #{tpu_custom_call.1} parent=0
    _
  %s8 = ssub.s32 1, %s6
  %s9 = scalar_select 0, %s8, %s6
  $region1: #{tpu_custom_call.1} parent=0
    #allocation6 [shape = 'u8[8192]{0}', space=vmem, size = 0x2000, scoped, tag = 'output window, operand 0, single buffered']
    #allocation7 [shape = 's32[1]{0}', space=sflag, size = 0x4, scoped, tag = 'scoped memory for tpu_custom_call.1']
    #allocation8 [shape = 'u8[8192]{0}', space=vmem, size = 0x2000, scoped, tag = 'output window, operand 1, single buffered']
    #allocation9 [shape = 's32[1]{0}', space=sflag, size = 0x4, scoped, tag = 'scoped memory for tpu_custom_call.1']
    %10 = vsyncpa [#allocation7], 0
    %11 = vsyncpa [#allocation9], 0
    // Predicated region
    $region2: #{tpu_custom_call.1} parent=1 // pred_check
      _
    $region3: #{tpu_custom_call.1} parent=1 // pred_check_branch
      %13 = sbr.rel (0) target = $region5
    $region4: #{tpu_custom_call.1} parent=1 // pred_region
      _
    $region5: #{tpu_custom_call.1} parent=1 // pred_fallthru
      _
    // Predicated region
    $region6: #{tpu_custom_call.1} parent=1 // pred_check
      _
    $region7: #{tpu_custom_call.1} parent=1 // pred_check_branch
      %15 = sbr.rel (0) target = $region9
    $region8: #{tpu_custom_call.1} parent=1 // pred_region
      _
    $region9: #{tpu_custom_call.1} parent=1 // pred_fallthru
      _
    // Predicated region
    $region10: #{tpu_custom_call.1} parent=1 // pred_check
      _
    $region11: #{tpu_custom_call.1} parent=1 // pred_check_branch
      %17 = sbr.rel (0) target = $region13
    $region12: #{tpu_custom_call.1} parent=1 // pred_region
      _
    $region13: #{tpu_custom_call.1} parent=1 // pred_fallthru
      _
    %p19 = scmp.eq.s32.totalorder 0, 0
    // Predicated region
    $region14: #{tpu_custom_call.1} parent=1 // pred_check
      %p20 = pneg %p19
    $region15: #{tpu_custom_call.1} parent=1 // pred_check_branch
      %22 = sbr.rel (%p20) target = $region17
    $region16: #{tpu_custom_call.1} parent=1 // pred_region
      %vm23 = vcmask 254976
      %24 = vst.msk [vmem:[#allocation2] sm:$0x3] %vm23, 0.0
    $region17: #{tpu_custom_call.1} parent=1 // pred_fallthru
      _
    %v25 = vld [vmem:[%s0] sm:$0xf]
    %v26 = vld [vmem:[%s0 + $0x4] sm:$0xf]
    %v27 = vld [vmem:[%s1] sm:$0xf]
    %v28 = vld [vmem:[%s2] sm:$0x1]
    %v30 = vlaneseq
    %v31 = vshrl.u32 %v30, 7
    %v32 = vsub.s32 0, %v31
    %v33 = vrot.slane %v28, %v32
    %v37 = vunpack.c.l.b16 %v25
    %v38 = vunpack.c.l.b16 %v26
    %v39 = vpack.c.b16 %v38, %v37
    %vm40 = vcmask 64512
    %v42 = vsel %vm40, %v39, 0
    %vm44 = vcmask 1043456
    %v46 = vsel %vm44, %v27, 0
    %48 = vmatprep.subr.bf16.mxu0 0
    %49 = vmatpush1.bf16.msra.mxu0 0
    %50 = vmatprep.subr.bf16.mxu0 0
    %51 = vmatpush1.bf16.msra.mxu0 0
    %52 = vmatprep.subr.bf16.mxu0 0
    %53 = vmatpush1.bf16.msra.mxu0 0
    %54 = vmatprep.subr.bf16.mxu0 0
    %55 = vmatpush1.bf16.msra.mxu0 0
    %56 = vmatprep.subr.bf16.mxu0 0
    %57 = vmatpush1.bf16.msra.mxu0 0
    %58 = vmatprep.subr.bf16.mxu0 0
    %59 = vmatpush1.bf16.msra.mxu0 0
    %60 = vmatprep.subr.bf16.mxu0 0
    %61 = vmatpush1.bf16.msra.mxu0 0
    %62 = vmatprep.subr.bf16.mxu0 0
    %63 = vmatpush1.bf16.msra.mxu0 %v46
    %64 = vmatprep.subr.bf16.mxu0 0
    %65 = vmatpush2.bf16.msra.mxu0 0
    %66 = vmatprep.subr.bf16.mxu0 0
    %67 = vmatpush2.bf16.msra.mxu0 0
    %68 = vmatprep.subr.bf16.mxu0 0
    %69 = vmatpush2.bf16.msra.mxu0 0
    %70 = vmatprep.subr.bf16.mxu0 0
    %71 = vmatpush2.bf16.msra.mxu0 0
    %72 = vmatprep.subr.bf16.mxu0 0
    %73 = vmatpush2.bf16.msra.mxu0 0
    %74 = vmatprep.subr.bf16.mxu0 0
    %75 = vmatpush2.bf16.msra.mxu0 0
    %76 = vmatprep.subr.bf16.mxu0 0
    %77 = vmatpush2.bf16.msra.mxu0 0
    %78 = vmatprep.subr.bf16.mxu0 0
    %79 = vmatpush2.bf16.msra.mxu0 0
    %80 = vmatprep.mubr.bf16.mxu0 0
    %81 = vmatmul.mubr.bf16.gmra.mxu0 %v42
    %v82 = vpop.f32.mrf.mxu0
    %v83 = vadd.f32 %v33, %v82
    %v84 = vpop.f32.mrf.mxu0
    %v85 = vpop.f32.mrf.mxu0
    %v86 = vadd.f32 %v33, %v85
    %v87 = vpop.f32.mrf.mxu0
    %88 = vdwg.mxu0
    %v89 = vtanh.pop %v83
    %v90 = vtanh.pop %v86
    %v91 = vmul.f32 %v83, 0.5
    %v92 = vmul.f32 %v86, 0.5
    %v93 = vtanh.pop %v91
    %v94 = vtanh.pop %v92
    %v95 = vadd.f32 %v93, 1.0
    %v96 = vadd.f32 %v94, 1.0
    %v97 = vmul.f32 %v95, 0.5
    %v98 = vmul.f32 %v96, 0.5
    %101 = vrot.lane.b32.xlu0 %v97, 96
    %v102 = vpop.permute.xlu0 %101
    %103 = vrot.lane.b32.xlu0 %v98, 96
    %v104 = vpop.permute.xlu0 %103
    %vm107 = vcmask 261120
    %108 = vst.msk [vmem:[#allocation3] sm:$0xff] %vm107, %v102
    %109 = vst.msk [vmem:[#allocation3 + $0x8] sm:$0xff] %vm107, %v104
    %v110 = vsub.f32 1.0, %v97
    %v111 = vsub.f32 1.0, %v98
    %114 = vrot.lane.b32.xlu0 %v89, 32
    %v115 = vpop.permute.xlu0 %114
    %116 = vrot.lane.b32.xlu0 %v90, 32
    %v117 = vpop.permute.xlu0 %116
    %v120 = vmul.f32 %v110, %v115
    %v121 = vmul.f32 %v111, %v117
    %124 = vrot.lane.b32.xlu0 %v120, 96
    %v125 = vpop.permute.xlu0 %124
    %126 = vrot.lane.b32.xlu0 %v121, 96
    %v127 = vpop.permute.xlu0 %126
    %130 = vst.msk [vmem:[#allocation4] sm:$0xff] %vm107, %v125
    %131 = vst.msk [vmem:[#allocation4 + $0x8] sm:$0xff] %vm107, %v127
    %132 = vrot.lane.b32.xlu0 %v97, 64
    %v133 = vpop.permute.xlu0 %132
    %134 = vrot.lane.b32.xlu0 %v98, 64
    %v135 = vpop.permute.xlu0 %134
    %138 = vst.msk [vmem:[#allocation5] sm:$0xff] %vm107, %v133
    %139 = vst.msk [vmem:[#allocation5 + $0x8] sm:$0xff] %vm107, %v135
    %v140 = vld [vmem:[#allocation2] sm:$0x3]
    %v141 = vld [vmem:[#allocation3] sm:$0x3]
    %v142 = vld [vmem:[#allocation4] sm:$0x3]
    %v143 = vmul.f32 %v141, %v140
    %v144 = vadd.f32 %v143, %v142
    %vm145 = vcmask 254976
    %146 = vst.msk [vmem:[#allocation8] sm:$0x3] %vm145, %v144
    %v147 = vld [vmem:[#allocation3 + $0x2] sm:$0x3]
    %v148 = vld [vmem:[#allocation4 + $0x2] sm:$0x3]
    %v149 = vmul.f32 %v147, %v144
    %v150 = vadd.f32 %v149, %v148
    %151 = vst.msk [vmem:[#allocation8 + $0x2] sm:$0x3] %vm145, %v150
    %v152 = vld [vmem:[#allocation3 + $0x4] sm:$0x3]
    %v153 = vld [vmem:[#allocation4 + $0x4] sm:$0x3]
    %v154 = vmul.f32 %v152, %v150
    %v155 = vadd.f32 %v154, %v153
    %156 = vst.msk [vmem:[#allocation8 + $0x4] sm:$0x3] %vm145, %v155
    %v157 = vld [vmem:[#allocation3 + $0x6] sm:$0x3]
    %v158 = vld [vmem:[#allocation4 + $0x6] sm:$0x3]
    %v159 = vmul.f32 %v157, %v155
    %v160 = vadd.f32 %v159, %v158
    %161 = vst.msk [vmem:[#allocation8 + $0x6] sm:$0x3] %vm145, %v160
    %v162 = vld [vmem:[#allocation3 + $0x8] sm:$0x3]
    %v163 = vld [vmem:[#allocation4 + $0x8] sm:$0x3]
    %v164 = vmul.f32 %v162, %v160
    %v165 = vadd.f32 %v164, %v163
    %166 = vst.msk [vmem:[#allocation8 + $0x8] sm:$0x3] %vm145, %v165
    %v167 = vld [vmem:[#allocation3 + $0xa] sm:$0x3]
    %v168 = vld [vmem:[#allocation4 + $0xa] sm:$0x3]
    %v169 = vmul.f32 %v167, %v165
    %v170 = vadd.f32 %v169, %v168
    %171 = vst.msk [vmem:[#allocation8 + $0xa] sm:$0x3] %vm145, %v170
    %v172 = vld [vmem:[#allocation3 + $0xc] sm:$0x3]
    %v173 = vld [vmem:[#allocation4 + $0xc] sm:$0x3]
    %v174 = vmul.f32 %v172, %v170
    %v175 = vadd.f32 %v174, %v173
    %176 = vst.msk [vmem:[#allocation8 + $0xc] sm:$0x3] %vm145, %v175
    %v177 = vld [vmem:[#allocation3 + $0xe] sm:$0x3]
    %v178 = vld [vmem:[#allocation4 + $0xe] sm:$0x3]
    %v179 = vmul.f32 %v177, %v175
    %v180 = vadd.f32 %v179, %v178
    %181 = vst.msk [vmem:[#allocation8 + $0xe] sm:$0x3] %vm145, %v180
    %182 = vst.msk [vmem:[#allocation2] sm:$0x3] %vm145, %v180
    %v183 = vld [vmem:[#allocation5] sm:$0xff]
    %v184 = vld [vmem:[#allocation5 + $0x8] sm:$0xff]
    %v185 = vld [vmem:[#allocation8] sm:$0xff]
    %v186 = vld [vmem:[#allocation8 + $0x8] sm:$0xff]
    %v187 = vmul.f32 %v183, %v185
    %v188 = vmul.f32 %v184, %v186
    %189 = vst.msk [vmem:[#allocation6] sm:$0xff] %vm107, %v187
    %190 = vst.msk [vmem:[#allocation6 + $0x8] sm:$0xff] %vm107, %v188
    // Predicated region
    $region18: #{tpu_custom_call.1} parent=1 // pred_check
      _
    $region19: #{tpu_custom_call.1} parent=1 // pred_check_branch
      %192 = sbr.rel (0) target = $region21
    $region20: #{tpu_custom_call.1} parent=1 // pred_region
      %s194 = ssub.s32 256, 256
      %195 = vsyncadd [#allocation7], %s194
      %s196 = sshll.u32 [#allocation6], 4
      %s197 = int_to_ptr.vmem [resolvable:$true] %s196
      %202 = dma.vmem_to_hbm [thread:$0]  %s197, 256, %s3, [#allocation7], 128, 128, 8
    $region21: #{tpu_custom_call.1} parent=1 // pred_fallthru
      _
    // Predicated region
    $region22: #{tpu_custom_call.1} parent=1 // pred_check
      _
    $region23: #{tpu_custom_call.1} parent=1 // pred_check_branch
      %204 = sbr.rel (0) target = $region25
    $region24: #{tpu_custom_call.1} parent=1 // pred_region
      %s206 = ssub.s32 256, 256
      %207 = vsyncadd [#allocation9], %s206
      %s208 = sshll.u32 [#allocation8], 4
      %s209 = int_to_ptr.vmem [resolvable:$true] %s208
      %214 = dma.vmem_to_hbm [thread:$0]  %s209, 256, %s4, [#allocation9], 128, 128, 8
    $region25: #{tpu_custom_call.1} parent=1 // pred_fallthru
      _
    // Predicated region
    $region26: #{tpu_custom_call.1} parent=1 // pred_check
      _
    $region27: #{tpu_custom_call.1} parent=1 // pred_check_branch
      %216 = sbr.rel (0) target = $region29
    $region28: #{tpu_custom_call.1} parent=1 // pred_region
      %217 = dma.done [#allocation7], 256
    $region29: #{tpu_custom_call.1} parent=1 // pred_fallthru
      _
    // Predicated region
    $region30: #{tpu_custom_call.1} parent=1 // pred_check
      _
    $region31: #{tpu_custom_call.1} parent=1 // pred_check_branch
      %219 = sbr.rel (0) target = $region33
    $region32: #{tpu_custom_call.1} parent=1 // pred_region
      %220 = dma.done [#allocation9], 256
    $region33: #{tpu_custom_call.1} parent=1 // pred_fallthru
      _
    %221 = vsyncpa [#allocation7], 1
    %222 = vsyncpa [#allocation9], 1

</llo_original>
